<compile_context>
chip_gen: v6e
topology: v6e:2x2x1
jax: 0.10.0
libtpu: 0.0.40
codegen_flags: <defaults>
</compile_context>

<pallas_src>
import jax
import jax.numpy as jnp
from jax.experimental import pallas as pl
from jax.experimental.pallas import tpu as pltpu

IN_FEATURES = 42
HIDDEN = 32
OUT_FEATURES = 24

TB_MAX = 4096          # batch-tile cap (multiple of 8); well under scoped VMEM everywhere
SINGLE_TILE_MAX = 1024  # below this, one tile covers the whole batch (block dim == array dim)


def _round8(n):
    return ((n + 7) // 8) * 8


def _mlp_kernel(x_ref, w1_ref, b1_ref, w2_ref, b2_ref, o_ref):
    # fc1: (tb, 42) @ (42, 32) + (1, 32), ReLU  (f32 accumulation on the MXU)
    h = jnp.dot(x_ref[...], w1_ref[...], preferred_element_type=jnp.float32)
    h = jnp.maximum(h + b1_ref[...], 0.0)
    # fc2: (tb, 32) @ (32, 24) + (1, 24)
    out = jnp.dot(h, w2_ref[...], preferred_element_type=jnp.float32)
    o_ref[...] = (out + b2_ref[...]).astype(o_ref.dtype)


@jax.jit
def static_model_forward(x, w1, b1, w2, b2):
    """Forward of static_model. Weights use PyTorch nn.Linear layout:
    w1: (32, 42), b1: (32,), w2: (24, 32), b2: (24,).  x: (B, 42)."""
    B = x.shape[0]

    # ---- batch-tile selection (shapes are static under jit) ----
    if B <= SINGLE_TILE_MAX:
        # Single tile covering the whole batch; block dim == full array dim is
        # always legal regardless of the 8-sublane granule, so no batch pad.
        tb = B
    else:
        # At least 2 tiles so v7x's two TensorCores both get work; tile is a
        # multiple of 8.  The trailing partial tile (if any) is handled by
        # Pallas' masked partial-block read/write -- no wrapper-side batch pad.
        tb = min(TB_MAX, _round8((B + 1) // 2))
    num_tiles = pl.cdiv(B, tb)

    # Weights in (in, out) layout so the kernel is a plain x @ W.  Tiny arrays;
    # the transpose is negligible next to streaming x / y.
    w1t = w1.T                                  # (42, 32)
    b1r = b1.reshape(1, HIDDEN)                 # (1, 32)
    w2t = w2.T                                  # (32, 24)
    b2r = b2.reshape(1, OUT_FEATURES)           # (1, 24)

    cost = pl.CostEstimate(
        flops=2 * B * (IN_FEATURES * HIDDEN + HIDDEN * OUT_FEATURES),
        transcendentals=0,
        bytes_accessed=4 * (B * IN_FEATURES + B * OUT_FEATURES
                            + IN_FEATURES * HIDDEN + HIDDEN * OUT_FEATURES
                            + HIDDEN + OUT_FEATURES),
    )

    return pl.pallas_call(
        _mlp_kernel,
        out_shape=jax.ShapeDtypeStruct((B, OUT_FEATURES), x.dtype),
        grid=(num_tiles,),
        in_specs=[
            pl.BlockSpec((tb, IN_FEATURES), lambda i: (i, 0)),       # x: streamed per tile
            pl.BlockSpec((IN_FEATURES, HIDDEN), lambda i: (0, 0)),   # weights: VMEM-resident
            pl.BlockSpec((1, HIDDEN), lambda i: (0, 0)),
            pl.BlockSpec((HIDDEN, OUT_FEATURES), lambda i: (0, 0)),
            pl.BlockSpec((1, OUT_FEATURES), lambda i: (0, 0)),
        ],
        out_specs=pl.BlockSpec((tb, OUT_FEATURES), lambda i: (i, 0)),
        compiler_params=pltpu.CompilerParams(
            dimension_semantics=("parallel",),   # v7x: shard batch tiles over 2 TCs
        ),
        cost_estimate=cost,
    )(x, w1t, b1r, w2t, b2r)


def init_params(key):
    """Deterministic PyTorch-style Linear init: U(-1/sqrt(fan_in), 1/sqrt(fan_in)).
    Weights kept in PyTorch (out_features, in_features) layout."""
    k1, k2, k3, k4 = jax.random.split(key, 4)
    bound1 = 1.0 / jnp.sqrt(jnp.float32(IN_FEATURES))
    bound2 = 1.0 / jnp.sqrt(jnp.float32(HIDDEN))
    w1 = jax.random.uniform(k1, (HIDDEN, IN_FEATURES), jnp.float32, -bound1, bound1)
    b1 = jax.random.uniform(k2, (HIDDEN,), jnp.float32, -bound1, bound1)
    w2 = jax.random.uniform(k3, (OUT_FEATURES, HIDDEN), jnp.float32, -bound2, bound2)
    b2 = jax.random.uniform(k4, (OUT_FEATURES,), jnp.float32, -bound2, bound2)
    return w1, b1, w2, b2


def _reference(x, w1, b1, w2, b2):
    # Pure-JAX reference with PyTorch semantics: y = relu(x @ W1.T + b1) @ W2.T + b2
    return jnp.maximum(x @ w1.T + b1, 0.0) @ w2.T + b2


if __name__ == "__main__":
    key = jax.random.PRNGKey(0)
    kx, kp, kx2 = jax.random.split(key, 3)
    w1, b1, w2, b2 = init_params(kp)

    # Small batch (single full-array tile path).
    B = 2
    x = jax.random.normal(kx, (B, IN_FEATURES), dtype=jnp.float32)
    out = jax.block_until_ready(static_model_forward(x, w1, b1, w2, b2))
    ref = _reference(x, w1, b1, w2, b2)
    assert out.shape == (B, OUT_FEATURES), out.shape
    assert jnp.allclose(out, ref, atol=1e-5, rtol=1e-5), "mismatch vs reference (B=2)"

    # Larger batch exercising the multi-tile grid + trailing partial block.
    B2 = 1037
    x2 = jax.random.normal(kx2, (B2, IN_FEATURES), dtype=jnp.float32)
    out2 = jax.block_until_ready(static_model_forward(x2, w1, b1, w2, b2))
    ref2 = _reference(x2, w1, b1, w2, b2)
    assert out2.shape == (B2, OUT_FEATURES), out2.shape
    assert jnp.allclose(out2, ref2, atol=1e-5, rtol=1e-5), "mismatch vs reference (B=1037)"

    print("KERNEL_OK")
</pallas_src>

<mosaic_0001>
module attributes {stable_mosaic.version = 11 : i64} {
  func.func @_mlp_kernel(%arg0: i32, %arg1: memref<2x42xf32, #tpu.memory_space<vmem>>, %arg2: memref<42x32xf32, #tpu.memory_space<vmem>>, %arg3: memref<1x32xf32, #tpu.memory_space<vmem>>, %arg4: memref<32x24xf32, #tpu.memory_space<vmem>>, %arg5: memref<1x24xf32, #tpu.memory_space<vmem>>, %arg6: memref<2x24xf32, #tpu.memory_space<vmem>>) attributes {dimension_semantics = [#tpu.dimension_semantics<parallel>], iteration_bounds = array<i64: 1>, scalar_prefetch = 0 : i64, scratch_operands = 0 : i64, tpu.core_type = #tpu.core_type<tc>, window_params = [{transform_indices = @transform_0, window_bounds = array<i64: 2, 42>}, {pipeline_mode = #tpu.pipeline_mode<synchronous>, transform_indices = @transform_1, window_bounds = array<i64: 42, 32>}, {pipeline_mode = #tpu.pipeline_mode<synchronous>, transform_indices = @transform_2, window_bounds = array<i64: 1, 32>}, {pipeline_mode = #tpu.pipeline_mode<synchronous>, transform_indices = @transform_3, window_bounds = array<i64: 32, 24>}, {pipeline_mode = #tpu.pipeline_mode<synchronous>, transform_indices = @transform_4, window_bounds = array<i64: 1, 24>}, {transform_indices = @transform_5, window_bounds = array<i64: 2, 24>}]} {
    %c0 = arith.constant 0 : index
    %c0_0 = arith.constant 0 : index
    %0 = vector.load %arg1[%c0, %c0_0] : memref<2x42xf32, #tpu.memory_space<vmem>>, vector<2x42xf32>
    %c0_1 = arith.constant 0 : index
    %c0_2 = arith.constant 0 : index
    %1 = vector.load %arg2[%c0_1, %c0_2] : memref<42x32xf32, #tpu.memory_space<vmem>>, vector<42x32xf32>
    %cst = arith.constant dense<0.000000e+00> : vector<2x32xf32>
    %2 = tpu.matmul %0, %1, %cst {dimension_numbers = #tpu.dot_dimension_numbers<[1], [0], [0], [1], [0, 0, 1, 1], [], []>} : vector<2x42xf32>, vector<42x32xf32>, vector<2x32xf32> -> vector<2x32xf32>
    %c0_3 = arith.constant 0 : index
    %c0_4 = arith.constant 0 : index
    %3 = vector.load %arg3[%c0_3, %c0_4] : memref<1x32xf32, #tpu.memory_space<vmem>>, vector<1x32xf32>
    %4 = vector.broadcast %3 : vector<1x32xf32> to vector<2x32xf32>
    %5 = arith.addf %2, %4 : vector<2x32xf32>
    %cst_5 = arith.constant 0.000000e+00 : f32
    %6 = vector.broadcast %cst_5 : f32 to vector<2x32xf32>
    %7 = arith.maximumf %5, %6 : vector<2x32xf32>
    %c0_6 = arith.constant 0 : index
    %c0_7 = arith.constant 0 : index
    %8 = vector.load %arg4[%c0_6, %c0_7] : memref<32x24xf32, #tpu.memory_space<vmem>>, vector<32x24xf32>
    %cst_8 = arith.constant dense<0.000000e+00> : vector<2x24xf32>
    %9 = tpu.matmul %7, %8, %cst_8 {dimension_numbers = #tpu.dot_dimension_numbers<[1], [0], [0], [1], [0, 0, 1, 1], [], []>} : vector<2x32xf32>, vector<32x24xf32>, vector<2x24xf32> -> vector<2x24xf32>
    %c0_9 = arith.constant 0 : index
    %c0_10 = arith.constant 0 : index
    %10 = vector.load %arg5[%c0_9, %c0_10] : memref<1x24xf32, #tpu.memory_space<vmem>>, vector<1x24xf32>
    %11 = vector.broadcast %10 : vector<1x24xf32> to vector<2x24xf32>
    %12 = arith.addf %9, %11 : vector<2x24xf32>
    %c0_11 = arith.constant 0 : index
    %c0_12 = arith.constant 0 : index
    %13 = vector.load %arg6[%c0_11, %c0_12] : memref<2x24xf32, #tpu.memory_space<vmem>>, vector<2x24xf32>
    tpu.vector_store %arg6[%c0_11, %c0_12], %12 {strides = array<i32>} : memref<2x24xf32, #tpu.memory_space<vmem>>, vector<2x24xf32>,
    return
  }
  func.func @transform_0(%arg0: i32) -> (i32, i32) {
    %c0_i32 = arith.constant 0 : i32
    %c0_i32_0 = arith.constant 0 : i32
    return %arg0, %c0_i32 : i32, i32
  }
  func.func @transform_1(%arg0: i32) -> (i32, i32) {
    %c0_i32 = arith.constant 0 : i32
    %c0_i32_0 = arith.constant 0 : i32
    %c0_i32_1 = arith.constant 0 : i32
    return %c0_i32, %c0_i32_0 : i32, i32
  }
  func.func @transform_2(%arg0: i32) -> (i32, i32) {
    %c0_i32 = arith.constant 0 : i32
    %c0_i32_0 = arith.constant 0 : i32
    %c0_i32_1 = arith.constant 0 : i32
    return %c0_i32, %c0_i32_0 : i32, i32
  }
  func.func @transform_3(%arg0: i32) -> (i32, i32) {
    %c0_i32 = arith.constant 0 : i32
    %c0_i32_0 = arith.constant 0 : i32
    %c0_i32_1 = arith.constant 0 : i32
    return %c0_i32, %c0_i32_0 : i32, i32
  }
  func.func @transform_4(%arg0: i32) -> (i32, i32) {
    %c0_i32 = arith.constant 0 : i32
    %c0_i32_0 = arith.constant 0 : i32
    %c0_i32_1 = arith.constant 0 : i32
    return %c0_i32, %c0_i32_0 : i32, i32
  }
  func.func @transform_5(%arg0: i32) -> (i32, i32) {
    %c0_i32 = arith.constant 0 : i32
    %c0_i32_0 = arith.constant 0 : i32
    return %arg0, %c0_i32 : i32, i32
  }
}

</mosaic_0001>

<llo_original>
// kernel: static_model_forward.1
$region0: #{static_model_forward.1}
  #allocation0 [shape = 'u32[]', space=smem, size = 0x4, offset = 0x4, fixed_abs, tag = 'smem constant byte address 0x4 - core index']
  #allocation1 [shape = 'u32[144,128]{1,0:T(1,128)}', space=vmem, size = 0x12000, scoped, tag = 'internal scratch']
  %s0 = inlined_call_operand.vmem [shape: f32[2,42], index: 0, kind: input, shape index: {}]
  %s1 = inlined_call_operand.vmem [shape: f32[42,32], index: 1, kind: input, shape index: {}]
  %s2 = inlined_call_operand.vmem [shape: f32[1,32], index: 2, kind: input, shape index: {}]
  %s3 = inlined_call_operand.vmem [shape: f32[32,24], index: 3, kind: input, shape index: {}]
  %s4 = inlined_call_operand.vmem [shape: f32[1,24], index: 4, kind: input, shape index: {}]
  %s5 = inlined_call_operand.hbm [shape: f32[2,24], index: 5, kind: output, shape index: {}]
  %s6 = sld [smem:[#allocation0]]
  $region30: #{static_model_forward.1} parent=0
    _
  %s8 = ssub.s32 1, %s6
  %s9 = scalar_select 0, %s8, %s6
  $region1: #{static_model_forward.1} parent=0
    #allocation2 [shape = 'u8[1024]{0}', space=vmem, size = 0x400, scoped, tag = 'output window, operand 0, single buffered']
    #allocation3 [shape = 's32[1]{0}', space=sflag, size = 0x4, scoped, tag = 'scoped memory for static_model_forward.1']
    %10 = vsyncpa [#allocation3], 0
    // Predicated region
    $region2: #{static_model_forward.1} parent=1 // pred_check
      _
    $region3: #{static_model_forward.1} parent=1 // pred_check_branch
      %12 = sbr.rel (0) target = $region5
    $region4: #{static_model_forward.1} parent=1 // pred_region
      _
    $region5: #{static_model_forward.1} parent=1 // pred_fallthru
      _
    // Predicated region
    $region6: #{static_model_forward.1} parent=1 // pred_check
      _
    $region7: #{static_model_forward.1} parent=1 // pred_check_branch
      %14 = sbr.rel (0) target = $region9
    $region8: #{static_model_forward.1} parent=1 // pred_region
      _
    $region9: #{static_model_forward.1} parent=1 // pred_fallthru
      _
    // Predicated region
    $region10: #{static_model_forward.1} parent=1 // pred_check
      _
    $region11: #{static_model_forward.1} parent=1 // pred_check_branch
      %16 = sbr.rel (0) target = $region13
    $region12: #{static_model_forward.1} parent=1 // pred_region
      _
    $region13: #{static_model_forward.1} parent=1 // pred_fallthru
      _
    // Predicated region
    $region14: #{static_model_forward.1} parent=1 // pred_check
      _
    $region15: #{static_model_forward.1} parent=1 // pred_check_branch
      %18 = sbr.rel (0) target = $region17
    $region16: #{static_model_forward.1} parent=1 // pred_region
      _
    $region17: #{static_model_forward.1} parent=1 // pred_fallthru
      _
    // Predicated region
    $region18: #{static_model_forward.1} parent=1 // pred_check
      _
    $region19: #{static_model_forward.1} parent=1 // pred_check_branch
      %20 = sbr.rel (0) target = $region21
    $region20: #{static_model_forward.1} parent=1 // pred_region
      _
    $region21: #{static_model_forward.1} parent=1 // pred_fallthru
      _
    %v21 = vld [vmem:[%s0] sm:$0x3]
    %v22 = vld [vmem:[%s1] sm:$0xff]
    %v23 = vld [vmem:[%s1 + $0x8] sm:$0xff]
    %v24 = vld [vmem:[%s1 + $0x10] sm:$0xff]
    %v25 = vld [vmem:[%s1 + $0x18] sm:$0xff]
    %v26 = vld [vmem:[%s1 + $0x20] sm:$0xff]
    %v27 = vld [vmem:[%s1 + $0x28] sm:$0x3]
    %v28 = vld [vmem:[%s2] sm:$0x1]
    %v30 = vlaneseq
    %v31 = vshrl.u32 %v30, 7
    %v32 = vsub.s32 0, %v31
    %v33 = vrot.slane %v28, %v32
    %vm35 = vcmask 343040
    %v37 = vsel %vm35, %v21, 0
    %vm39 = vcmask 1041408
    %v41 = vsel %vm39, %v27, 0
    %43 = vmatprep.subr.mxu0 0.0
    %44 = vmatpush1.msra.mxu0 0.0
    %45 = vmatprep.subr.mxu0 0.0
    %46 = vmatpush1.msra.mxu0 0.0
    %47 = vmatprep.subr.mxu0 0.0
    %48 = vmatpush1.msra.mxu0 0.0
    %49 = vmatprep.subr.mxu0 0.0
    %50 = vmatpush1.msra.mxu0 0.0
    %51 = vmatprep.subr.mxu0 0.0
    %52 = vmatpush1.msra.mxu0 0.0
    %53 = vmatprep.subr.mxu0 0.0
    %54 = vmatpush1.msra.mxu0 0.0
    %55 = vmatprep.subr.mxu0 0.0
    %56 = vmatpush1.msra.mxu0 0.0
    %57 = vmatprep.subr.mxu0 0.0
    %58 = vmatpush1.msra.mxu0 0.0
    %59 = vmatprep.subr.mxu0 0.0
    %60 = vmatpush1.msra.mxu0 0.0
    %61 = vmatprep.subr.mxu0 0.0
    %62 = vmatpush1.msra.mxu0 0.0
    %63 = vmatprep.subr.mxu0 0.0
    %64 = vmatpush1.msra.mxu0 %v41
    %65 = vmatprep.subr.mxu0 0.0
    %66 = vmatpush1.msra.mxu0 %v26
    %67 = vmatprep.subr.mxu0 0.0
    %68 = vmatpush1.msra.mxu0 %v25
    %69 = vmatprep.subr.mxu0 0.0
    %70 = vmatpush1.msra.mxu0 %v24
    %71 = vmatprep.subr.mxu0 0.0
    %72 = vmatpush1.msra.mxu0 %v23
    %73 = vmatprep.subr.mxu0 0.0
    %74 = vmatpush1.msra.mxu0 %v22
    %75 = vmatprep.subr.mxu0 0.0
    %76 = vmatpush2.msra.mxu0 0.0
    %77 = vmatprep.subr.mxu0 0.0
    %78 = vmatpush2.msra.mxu0 0.0
    %79 = vmatprep.subr.mxu0 0.0
    %80 = vmatpush2.msra.mxu0 0.0
    %81 = vmatprep.subr.mxu0 0.0
    %82 = vmatpush2.msra.mxu0 0.0
    %83 = vmatprep.subr.mxu0 0.0
    %84 = vmatpush2.msra.mxu0 0.0
    %85 = vmatprep.subr.mxu0 0.0
    %86 = vmatpush2.msra.mxu0 0.0
    %87 = vmatprep.subr.mxu0 0.0
    %88 = vmatpush2.msra.mxu0 0.0
    %89 = vmatprep.subr.mxu0 0.0
    %90 = vmatpush2.msra.mxu0 0.0
    %91 = vmatprep.subr.mxu0 0.0
    %92 = vmatpush2.msra.mxu0 0.0
    %93 = vmatprep.subr.mxu0 0.0
    %94 = vmatpush2.msra.mxu0 0.0
    %95 = vmatprep.subr.mxu0 0.0
    %96 = vmatpush2.msra.mxu0 0.0
    %97 = vmatprep.subr.mxu0 0.0
    %98 = vmatpush2.msra.mxu0 0.0
    %99 = vmatprep.subr.mxu0 0.0
    %100 = vmatpush2.msra.mxu0 0.0
    %101 = vmatprep.subr.mxu0 0.0
    %102 = vmatpush2.msra.mxu0 0.0
    %103 = vmatprep.subr.mxu0 0.0
    %104 = vmatpush2.msra.mxu0 0.0
    %105 = vmatprep.subr.mxu0 0.0
    %106 = vmatpush2.msra.mxu0 0.0
    %107 = vmatprep.mubr.f32.mxu0 0.0
    %108 = vmatmul.mubr.f32.gmra.mxu0 %v37
    %v109 = vpop.f32.mrf.mxu0
    %v110 = vadd.f32 %v33, %v109
    %v111 = vpop.f32.mrf.mxu0
    %112 = vdwg.mxu0
    %v113 = vmax.f32 %v110, 0.0
    %v114 = vld [vmem:[%s3] sm:$0xff]
    %v115 = vld [vmem:[%s3 + $0x8] sm:$0xff]
    %v116 = vld [vmem:[%s3 + $0x10] sm:$0xff]
    %v117 = vld [vmem:[%s3 + $0x18] sm:$0xff]
    %v118 = vld [vmem:[%s4] sm:$0x1]
    %v120 = vlaneseq
    %v121 = vshrl.u32 %v120, 7
    %v122 = vsub.s32 0, %v121
    %v123 = vrot.slane %v118, %v122
    %vm125 = vcmask 261120
    %v127 = vsel %vm125, %v113, 0
    %129 = vmatprep.subr.mxu0 0.0
    %130 = vmatpush1.msra.mxu0 0.0
    %131 = vmatprep.subr.mxu0 0.0
    %132 = vmatpush1.msra.mxu0 0.0
    %133 = vmatprep.subr.mxu0 0.0
    %134 = vmatpush1.msra.mxu0 0.0
    %135 = vmatprep.subr.mxu0 0.0
    %136 = vmatpush1.msra.mxu0 0.0
    %137 = vmatprep.subr.mxu0 0.0
    %138 = vmatpush1.msra.mxu0 0.0
    %139 = vmatprep.subr.mxu0 0.0
    %140 = vmatpush1.msra.mxu0 0.0
    %141 = vmatprep.subr.mxu0 0.0
    %142 = vmatpush1.msra.mxu0 0.0
    %143 = vmatprep.subr.mxu0 0.0
    %144 = vmatpush1.msra.mxu0 0.0
    %145 = vmatprep.subr.mxu0 0.0
    %146 = vmatpush1.msra.mxu0 0.0
    %147 = vmatprep.subr.mxu0 0.0
    %148 = vmatpush1.msra.mxu0 0.0
    %149 = vmatprep.subr.mxu0 0.0
    %150 = vmatpush1.msra.mxu0 0.0
    %151 = vmatprep.subr.mxu0 0.0
    %152 = vmatpush1.msra.mxu0 0.0
    %153 = vmatprep.subr.mxu0 0.0
    %154 = vmatpush1.msra.mxu0 %v117
    %155 = vmatprep.subr.mxu0 0.0
    %156 = vmatpush1.msra.mxu0 %v116
    %157 = vmatprep.subr.mxu0 0.0
    %158 = vmatpush1.msra.mxu0 %v115
    %159 = vmatprep.subr.mxu0 0.0
    %160 = vmatpush1.msra.mxu0 %v114
    %161 = vmatprep.subr.mxu0 0.0
    %162 = vmatpush2.msra.mxu0 0.0
    %163 = vmatprep.subr.mxu0 0.0
    %164 = vmatpush2.msra.mxu0 0.0
    %165 = vmatprep.subr.mxu0 0.0
    %166 = vmatpush2.msra.mxu0 0.0
    %167 = vmatprep.subr.mxu0 0.0
    %168 = vmatpush2.msra.mxu0 0.0
    %169 = vmatprep.subr.mxu0 0.0
    %170 = vmatpush2.msra.mxu0 0.0
    %171 = vmatprep.subr.mxu0 0.0
    %172 = vmatpush2.msra.mxu0 0.0
    %173 = vmatprep.subr.mxu0 0.0
    %174 = vmatpush2.msra.mxu0 0.0
    %175 = vmatprep.subr.mxu0 0.0
    %176 = vmatpush2.msra.mxu0 0.0
    %177 = vmatprep.subr.mxu0 0.0
    %178 = vmatpush2.msra.mxu0 0.0
    %179 = vmatprep.subr.mxu0 0.0
    %180 = vmatpush2.msra.mxu0 0.0
    %181 = vmatprep.subr.mxu0 0.0
    %182 = vmatpush2.msra.mxu0 0.0
    %183 = vmatprep.subr.mxu0 0.0
    %184 = vmatpush2.msra.mxu0 0.0
    %185 = vmatprep.subr.mxu0 0.0
    %186 = vmatpush2.msra.mxu0 0.0
    %187 = vmatprep.subr.mxu0 0.0
    %188 = vmatpush2.msra.mxu0 0.0
    %189 = vmatprep.subr.mxu0 0.0
    %190 = vmatpush2.msra.mxu0 0.0
    %191 = vmatprep.subr.mxu0 0.0
    %192 = vmatpush2.msra.mxu0 0.0
    %193 = vmatprep.mubr.f32.mxu0 0.0
    %194 = vmatmul.mubr.f32.gmra.mxu0 %v127
    %v195 = vpop.f32.mrf.mxu0
    %v196 = vadd.f32 %v123, %v195
    %v197 = vpop.f32.mrf.mxu0
    %198 = vdwg.mxu0
    %vm199 = vcmask 189440
    %200 = vst.msk [vmem:[#allocation2] sm:$0x3] %vm199, %v196
    // Predicated region
    $region22: #{static_model_forward.1} parent=1 // pred_check
      _
    $region23: #{static_model_forward.1} parent=1 // pred_check_branch
      %202 = sbr.rel (0) target = $region25
    $region24: #{static_model_forward.1} parent=1 // pred_region
      %s204 = ssub.s32 32, 32
      %205 = vsyncadd [#allocation3], %s204
      %s207 = sshll.u32 [#allocation2], 4
      %s208 = int_to_ptr.vmem [resolvable:$true] %s207
      %210 = dma.vmem_to_hbm [thread:$0]  %s208, 32, %s5, [#allocation3]
    $region25: #{static_model_forward.1} parent=1 // pred_fallthru
      _
    // Predicated region
    $region26: #{static_model_forward.1} parent=1 // pred_check
      _
    $region27: #{static_model_forward.1} parent=1 // pred_check_branch
      %212 = sbr.rel (0) target = $region29
    $region28: #{static_model_forward.1} parent=1 // pred_region
      %213 = dma.done [#allocation3], 32
    $region29: #{static_model_forward.1} parent=1 // pred_fallthru
      _
    %214 = vsyncpa [#allocation3], 1

</llo_original>
